<compile_context>
chip_gen: v6e
topology: v6e:2x2x1
jax: 0.10.0
libtpu: 0.0.40
codegen_flags: <defaults>
</compile_context>

<pallas_src>
import math

import jax
import jax.numpy as jnp
from jax import lax
from jax.experimental import pallas as pl
from jax.experimental.pallas import tpu as pltpu


# ----------------------------------------------------------------------------
# Shared per-layer cell math.  Gate column order is [i, f, o, g] (permuted at
# init), so sigmoid covers lanes [0, 3H) and tanh covers lanes [3H, 4H).
# ----------------------------------------------------------------------------
def _lstm_cell_math(gates_in, h_dot, bias, c_prev, H):
    gates = gates_in + h_dot + bias                      # (B, 4H) float32
    sig = jax.nn.sigmoid(gates[:, : 3 * H])              # i | f | o
    g_g = jnp.tanh(gates[:, 3 * H:])                     # g
    i_g = sig[:, 0 * H:1 * H]
    f_g = sig[:, 1 * H:2 * H]
    o_g = sig[:, 2 * H:3 * H]
    c_new = f_g * c_prev + i_g * g_g                     # f32 cell state
    h_new = o_g * jnp.tanh(c_new)
    return h_new, c_new


# ----------------------------------------------------------------------------
# Path A (small/medium): single grid step, all layer weights resident in VMEM,
# unrolled in-kernel loop over layers.  No per-layer launch / pipeline
# overhead, weights are DMA'd from HBM exactly once.
# ----------------------------------------------------------------------------
def _stacked_lstm_fused_kernel(x_ref, h0_ref, c0_ref, wih0_ref, wihr_ref,
                               whh_ref, b_ref, h1_ref, c1_ref):
    # x_ref   : (B, Din)       layer-0 external input
    # h0_ref  : (L, B, H)      previous hidden states
    # c0_ref  : (L, B, H)      previous cell states
    # wih0_ref: (Din, 4H)      layer-0 W_ih^T               (bf16, [i|f|o|g])
    # wihr_ref: (L, H, 4H)     layers>=1 W_ih^T (slot 0 is an unused dummy)
    # whh_ref : (L, H, 4H)     per-layer W_hh^T
    # b_ref   : (L, 1, 4H)     per-layer b_ih + b_hh        (f32)
    # h1_ref, c1_ref: (L, B, H) outputs
    L, _, H = h0_ref.shape
    cdt = whh_ref.dtype  # MXU compute dtype (bf16)

    def run_layer(l, gates_in):
        h_dot = jnp.dot(h0_ref[l].astype(cdt), whh_ref[l],
                        preferred_element_type=jnp.float32)
        h_new, c_new = _lstm_cell_math(gates_in, h_dot, b_ref[l],
                                       c0_ref[l].astype(jnp.float32), H)
        h1_ref[l] = h_new.astype(h1_ref.dtype)
        c1_ref[l] = c_new.astype(c1_ref.dtype)
        return h_new

    # Layer 0: external input against its own (un-padded) weight.
    gates0 = jnp.dot(x_ref[...].astype(cdt), wih0_ref[...],
                     preferred_element_type=jnp.float32)
    h_carry = run_layer(0, gates0)

    # Layers 1..L-1: previous layer's hidden state is the input.
    if L > 1:
        def body(l, h_prev):
            gates_in = jnp.dot(h_prev.astype(cdt), wihr_ref[l],
                               preferred_element_type=jnp.float32)
            return run_layer(l, gates_in)

        lax.fori_loop(1, L, body, h_carry, unroll=True)


def _forward_fused(x, h_0, c_0, w_ih0, w_ih_r, w_hh, b, vmem_limit):
    L, B, H = h_0.shape
    Din = x.shape[1]
    return pl.pallas_call(
        _stacked_lstm_fused_kernel,
        grid=(1,),
        in_specs=[
            pl.BlockSpec((B, Din), lambda i: (0, 0)),
            pl.BlockSpec((L, B, H), lambda i: (0, 0, 0)),
            pl.BlockSpec((L, B, H), lambda i: (0, 0, 0)),
            pl.BlockSpec((Din, 4 * H), lambda i: (0, 0)),
            pl.BlockSpec((L, H, 4 * H), lambda i: (0, 0, 0)),
            pl.BlockSpec((L, H, 4 * H), lambda i: (0, 0, 0)),
            pl.BlockSpec((L, 1, 4 * H), lambda i: (0, 0, 0)),
        ],
        out_specs=(
            pl.BlockSpec((L, B, H), lambda i: (0, 0, 0)),
            pl.BlockSpec((L, B, H), lambda i: (0, 0, 0)),
        ),
        out_shape=(
            jax.ShapeDtypeStruct((L, B, H), h_0.dtype),
            jax.ShapeDtypeStruct((L, B, H), h_0.dtype),   # c emitted in final dtype
        ),
        compiler_params=pltpu.CompilerParams(
            dimension_semantics=("arbitrary",),
            vmem_limit_bytes=vmem_limit),
    )(x, h_0, c_0, w_ih0, w_ih_r, w_hh, b)


# ----------------------------------------------------------------------------
# Path B (large): one grid step per layer; per-layer weight blocks are
# double-buffered by the Pallas pipeline, h is carried between layers in VMEM.
# ----------------------------------------------------------------------------
def _stacked_lstm_layer_kernel(x_ref, h0_ref, c0_ref, wih0_ref, wihr_ref,
                               whh_ref, b_ref, h1_ref, c1_ref, hcar_ref):
    l = pl.program_id(0)
    H = h0_ref.shape[-1]
    cdt = whh_ref.dtype

    def first_layer_in():
        return jnp.dot(x_ref[...].astype(cdt), wih0_ref[...],
                       preferred_element_type=jnp.float32)

    def later_layer_in():
        return jnp.dot(hcar_ref[...].astype(cdt), wihr_ref[...],
                       preferred_element_type=jnp.float32)

    gates_in = lax.cond(l == 0, first_layer_in, later_layer_in)
    h_dot = jnp.dot(h0_ref[...].astype(cdt), whh_ref[...],
                    preferred_element_type=jnp.float32)
    h_new, c_new = _lstm_cell_math(gates_in, h_dot, b_ref[...],
                                   c0_ref[...].astype(jnp.float32), H)
    h1_ref[...] = h_new.astype(h1_ref.dtype)
    c1_ref[...] = c_new.astype(c1_ref.dtype)

    @pl.when(l + 1 < pl.num_programs(0))
    def _():
        hcar_ref[...] = h_new


def _forward_layer_grid(x, h_0, c_0, w_ih0, w_ih_r, w_hh, b, vmem_limit):
    L, B, H = h_0.shape
    Din = x.shape[1]
    # TODO(synk): for very large H (>~2k) also tile the 4H gate axis so a
    # single weight block fits v7x's 64 MiB VMEM.
    return pl.pallas_call(
        _stacked_lstm_layer_kernel,
        grid=(L,),
        in_specs=[
            pl.BlockSpec((B, Din), lambda l: (0, 0)),                 # resident
            pl.BlockSpec((None, B, H), lambda l: (l, 0, 0)),
            pl.BlockSpec((None, B, H), lambda l: (l, 0, 0)),
            pl.BlockSpec((Din, 4 * H), lambda l: (0, 0)),             # resident
            pl.BlockSpec((None, H, 4 * H), lambda l: (l, 0, 0)),
            pl.BlockSpec((None, H, 4 * H), lambda l: (l, 0, 0)),
            pl.BlockSpec((None, 1, 4 * H), lambda l: (l, 0, 0)),
        ],
        out_specs=(
            pl.BlockSpec((None, B, H), lambda l: (l, 0, 0)),
            pl.BlockSpec((None, B, H), lambda l: (l, 0, 0)),
        ),
        out_shape=(
            jax.ShapeDtypeStruct((L, B, H), h_0.dtype),
            jax.ShapeDtypeStruct((L, B, H), h_0.dtype),
        ),
        scratch_shapes=[pltpu.VMEM((B, H), jnp.float32)],             # h carry
        compiler_params=pltpu.CompilerParams(
            dimension_semantics=("arbitrary",),                       # serial chain
            vmem_limit_bytes=vmem_limit),
    )(x, h_0, c_0, w_ih0, w_ih_r, w_hh, b)


def _nbytes(a):
    return a.size * a.dtype.itemsize


_FUSED_BUDGET_BYTES = 24 * 1024 * 1024   # keep everything VMEM-resident below this


def _stacked_lstm_forward(x, h_0, c_0, w_ih0, w_ih_r, w_hh, b,
                          *, force_layer_grid=False):
    operands = (x, h_0, c_0, w_ih0, w_ih_r, w_hh, b)
    est = sum(_nbytes(a) for a in operands) + 2 * _nbytes(h_0)   # + outputs
    # Raise the scoped VMEM limit with headroom, but stay under v7x's 64 MiB
    # physical VMEM (also covers v5e's small 16 MiB default scoped limit).
    vmem_limit = int(min(max(4 * est, 16 << 20), 48 << 20))
    if force_layer_grid or est > _FUSED_BUDGET_BYTES:
        return _forward_layer_grid(x, h_0, c_0, w_ih0, w_ih_r, w_hh, b,
                                   vmem_limit)
    return _forward_fused(x, h_0, c_0, w_ih0, w_ih_r, w_hh, b, vmem_limit)


# ----------------------------------------------------------------------------
# StackedLSTM module (parameters + forward), mirroring the PyTorch module.
# ----------------------------------------------------------------------------
class StackedLSTM:
    def __init__(self, num_layers, input_size, hidden_size, dropout, key,
                 weight_dtype=jnp.bfloat16):
        self.num_layers = num_layers
        self.hidden_size = hidden_size
        self.input_size = input_size
        self.dropout = dropout            # identity in inference mode
        self.weight_dtype = weight_dtype

        H = hidden_size
        k = 1.0 / math.sqrt(H)
        # Row permutation of the PyTorch gate order [i, f, g, o] -> [i, f, o, g]
        # so sigmoid / tanh each act on one contiguous lane slab in the kernel.
        perm = jnp.concatenate([jnp.arange(0, H), jnp.arange(H, 2 * H),
                                jnp.arange(3 * H, 4 * H), jnp.arange(2 * H, 3 * H)])

        w_ih0 = None
        w_ih_r = [jnp.zeros((H, 4 * H), jnp.float32)]   # dummy slot for layer 0
        w_hh_list, b_list = [], []
        self.reference_params = []                      # f32, PyTorch layout
        in_size = input_size
        for layer in range(num_layers):
            key, k1, k2, k3, k4 = jax.random.split(key, 5)
            # PyTorch LSTMCell params: W_ih (4H, in), W_hh (4H, H), b_ih, b_hh.
            w_ih = jax.random.uniform(k1, (4 * H, in_size), jnp.float32, -k, k)
            w_hh = jax.random.uniform(k2, (4 * H, H), jnp.float32, -k, k)
            b_ih = jax.random.uniform(k3, (4 * H,), jnp.float32, -k, k)
            b_hh = jax.random.uniform(k4, (4 * H,), jnp.float32, -k, k)
            self.reference_params.append((w_ih, w_hh, b_ih, b_hh))

            w_ih_t = w_ih[perm].T                        # (in_size, 4H), [i|f|o|g]
            w_hh_t = w_hh[perm].T                        # (H, 4H)
            bias = (b_ih + b_hh)[perm].reshape(1, 4 * H)
            if layer == 0:
                w_ih0 = w_ih_t
            else:
                w_ih_r.append(w_ih_t)
            w_hh_list.append(w_hh_t)
            b_list.append(bias)
            in_size = H

        # bf16 weights: halves HBM traffic / VMEM; GEMMs accumulate in f32.
        self.w_ih0 = w_ih0.astype(weight_dtype)              # (input_size, 4H)
        self.w_ih_r = jnp.stack(w_ih_r).astype(weight_dtype) # (L, H, 4H), slot 0 unused
        self.w_hh = jnp.stack(w_hh_list).astype(weight_dtype)# (L, H, 4H)
        self.b = jnp.stack(b_list)                            # (L, 1, 4H) f32

    def __call__(self, inp, hidden, force_layer_grid=False):
        h_0, c_0 = hidden  # (num_layers, B, H) each
        h_1, c_1 = _stacked_lstm_forward(
            inp, h_0, c_0, self.w_ih0, self.w_ih_r, self.w_hh, self.b,
            force_layer_grid=force_layer_grid)
        # Module output = last layer's new hidden state (no dropout after last).
        return h_1[-1], (h_1, c_1)


# ----------------------------------------------------------------------------
# Pure-JAX reference of the PyTorch StackedLSTM.forward (eval mode), applying
# the same bf16 weight/activation quantization the kernel applies.
# ----------------------------------------------------------------------------
def _reference_forward(params, x, h_0, c_0, weight_dtype):
    H = h_0.shape[-1]
    h_list, c_list = [], []
    inp = x
    for l, (w_ih, w_hh, b_ih, b_hh) in enumerate(params):
        wi = w_ih.astype(weight_dtype).astype(jnp.float32)
        wh = w_hh.astype(weight_dtype).astype(jnp.float32)
        xq = inp.astype(weight_dtype).astype(jnp.float32)
        hq = h_0[l].astype(weight_dtype).astype(jnp.float32)
        gates = (jnp.dot(xq, wi.T, precision=lax.Precision.HIGHEST)
                 + jnp.dot(hq, wh.T, precision=lax.Precision.HIGHEST)
                 + b_ih + b_hh)
        i = jax.nn.sigmoid(gates[:, 0 * H:1 * H])
        f = jax.nn.sigmoid(gates[:, 1 * H:2 * H])
        g = jnp.tanh(gates[:, 2 * H:3 * H])
        o = jax.nn.sigmoid(gates[:, 3 * H:4 * H])
        c_new = f * c_0[l] + i * g
        h_new = o * jnp.tanh(c_new)
        h_list.append(h_new)
        c_list.append(c_new)
        inp = h_new                      # dropout is identity in eval mode
    return inp, (jnp.stack(h_list), jnp.stack(c_list))


if __name__ == "__main__":
    num_layers = 2
    input_size = 32
    hidden_size = 32
    batch = 8

    key = jax.random.PRNGKey(0)
    key, kp, kx, kh, kc = jax.random.split(key, 5)

    model = StackedLSTM(num_layers, input_size, hidden_size, dropout=0.3, key=kp)

    x = jax.random.normal(kx, (batch, input_size), jnp.float32)
    h0 = jax.random.normal(kh, (num_layers, batch, hidden_size), jnp.float32)
    c0 = jax.random.normal(kc, (num_layers, batch, hidden_size), jnp.float32)

    # Fused single-step path (selected automatically at these sizes).
    out, (h1, c1) = model(x, (h0, c0))
    jax.block_until_ready((out, h1, c1))

    # Also exercise the per-layer pipelined path and check it agrees.
    out_g, (h1_g, c1_g) = model(x, (h0, c0), force_layer_grid=True)
    jax.block_until_ready((out_g, h1_g, c1_g))

    # Pure-JAX reference of the PyTorch math.
    out_r, (h1_r, c1_r) = _reference_forward(model.reference_params, x, h0, c0,
                                             model.weight_dtype)

    assert out.shape == (batch, hidden_size)
    assert h1.shape == (num_layers, batch, hidden_size)
    assert c1.shape == (num_layers, batch, hidden_size)
    assert bool(jnp.all(jnp.isfinite(out)))
    assert bool(jnp.allclose(h1, h1_g, atol=1e-5, rtol=1e-5))
    assert bool(jnp.allclose(c1, c1_g, atol=1e-5, rtol=1e-5))
    assert bool(jnp.allclose(h1, h1_r, atol=1e-3, rtol=1e-3))
    assert bool(jnp.allclose(c1, c1_r, atol=1e-3, rtol=1e-3))
    assert bool(jnp.allclose(out, h1[-1]))

    print("KERNEL_OK")
</pallas_src>

<mosaic_0001>
module attributes {stable_mosaic.version = 11 : i64} {
  func.func @_stacked_lstm_fused_kernel(%arg0: i32, %arg1: memref<8x32xf32, #tpu.memory_space<vmem>>, %arg2: memref<2x8x32xf32, #tpu.memory_space<vmem>>, %arg3: memref<2x8x32xf32, #tpu.memory_space<vmem>>, %arg4: memref<32x128xbf16, #tpu.memory_space<vmem>>, %arg5: memref<2x32x128xbf16, #tpu.memory_space<vmem>>, %arg6: memref<2x32x128xbf16, #tpu.memory_space<vmem>>, %arg7: memref<2x1x128xf32, #tpu.memory_space<vmem>>, %arg8: memref<2x8x32xf32, #tpu.memory_space<vmem>>, %arg9: memref<2x8x32xf32, #tpu.memory_space<vmem>>) attributes {dimension_semantics = [#tpu.dimension_semantics<arbitrary>], iteration_bounds = array<i64: 1>, scalar_prefetch = 0 : i64, scratch_operands = 0 : i64, tpu.core_type = #tpu.core_type<tc>, window_params = [{pipeline_mode = #tpu.pipeline_mode<synchronous>, transform_indices = @transform_0, window_bounds = array<i64: 8, 32>}, {pipeline_mode = #tpu.pipeline_mode<synchronous>, transform_indices = @transform_1, window_bounds = array<i64: 2, 8, 32>}, {pipeline_mode = #tpu.pipeline_mode<synchronous>, transform_indices = @transform_2, window_bounds = array<i64: 2, 8, 32>}, {pipeline_mode = #tpu.pipeline_mode<synchronous>, transform_indices = @transform_3, window_bounds = array<i64: 32, 128>}, {pipeline_mode = #tpu.pipeline_mode<synchronous>, transform_indices = @transform_4, window_bounds = array<i64: 2, 32, 128>}, {pipeline_mode = #tpu.pipeline_mode<synchronous>, transform_indices = @transform_5, window_bounds = array<i64: 2, 32, 128>}, {pipeline_mode = #tpu.pipeline_mode<synchronous>, transform_indices = @transform_6, window_bounds = array<i64: 2, 1, 128>}, {pipeline_mode = #tpu.pipeline_mode<synchronous>, transform_indices = @transform_7, window_bounds = array<i64: 2, 8, 32>}, {pipeline_mode = #tpu.pipeline_mode<synchronous>, transform_indices = @transform_8, window_bounds = array<i64: 2, 8, 32>}]} {
    %c0 = arith.constant 0 : index
    %c0_0 = arith.constant 0 : index
    %0 = vector.load %arg1[%c0, %c0_0] : memref<8x32xf32, #tpu.memory_space<vmem>>, vector<8x32xf32>
    %1 = arith.truncf %0 : vector<8x32xf32> to vector<8x32xbf16>
    %c0_1 = arith.constant 0 : index
    %c0_2 = arith.constant 0 : index
    %2 = vector.load %arg4[%c0_1, %c0_2] : memref<32x128xbf16, #tpu.memory_space<vmem>>, vector<32x128xbf16>
    %cst = arith.constant dense<0.000000e+00> : vector<8x128xf32>
    %3 = tpu.matmul %1, %2, %cst {dimension_numbers = #tpu.dot_dimension_numbers<[1], [0], [0], [1], [0, 0, 1, 1], [], []>} : vector<8x32xbf16>, vector<32x128xbf16>, vector<8x128xf32> -> vector<8x128xf32>
    %c0_3 = arith.constant 0 : index
    %c0_4 = arith.constant 0 : index
    %c0_5 = arith.constant 0 : index
    %4 = vector.load %arg2[%c0_3, %c0_4, %c0_5] : memref<2x8x32xf32, #tpu.memory_space<vmem>>, vector<1x8x32xf32>
    %5 = vector.shape_cast %4 : vector<1x8x32xf32> to vector<8x32xf32>
    %6 = arith.truncf %5 : vector<8x32xf32> to vector<8x32xbf16>
    %c0_6 = arith.constant 0 : index
    %c0_7 = arith.constant 0 : index
    %c0_8 = arith.constant 0 : index
    %7 = vector.load %arg6[%c0_6, %c0_7, %c0_8] : memref<2x32x128xbf16, #tpu.memory_space<vmem>>, vector<1x32x128xbf16>
    %8 = vector.shape_cast %7 : vector<1x32x128xbf16> to vector<32x128xbf16>
    %cst_9 = arith.constant dense<0.000000e+00> : vector<8x128xf32>
    %9 = tpu.matmul %6, %8, %cst_9 {dimension_numbers = #tpu.dot_dimension_numbers<[1], [0], [0], [1], [0, 0, 1, 1], [], []>} : vector<8x32xbf16>, vector<32x128xbf16>, vector<8x128xf32> -> vector<8x128xf32>
    %c0_10 = arith.constant 0 : index
    %c0_11 = arith.constant 0 : index
    %c0_12 = arith.constant 0 : index
    %10 = vector.load %arg7[%c0_10, %c0_11, %c0_12] : memref<2x1x128xf32, #tpu.memory_space<vmem>>, vector<1x1x128xf32>
    %11 = vector.shape_cast %10 : vector<1x1x128xf32> to vector<1x128xf32>
    %c0_13 = arith.constant 0 : index
    %c0_14 = arith.constant 0 : index
    %c0_15 = arith.constant 0 : index
    %12 = vector.load %arg3[%c0_13, %c0_14, %c0_15] : memref<2x8x32xf32, #tpu.memory_space<vmem>>, vector<1x8x32xf32>
    %13 = vector.shape_cast %12 : vector<1x8x32xf32> to vector<8x32xf32>
    %14 = arith.addf %3, %9 : vector<8x128xf32>
    %15 = vector.broadcast %11 : vector<1x128xf32> to vector<8x128xf32>
    %16 = arith.addf %14, %15 : vector<8x128xf32>
    %17 = vector.extract_strided_slice %16 {offsets = [0, 0], sizes = [8, 96], strides = [1, 1]} : vector<8x128xf32> to vector<8x96xf32>
    %18 = arith.negf %17 : vector<8x96xf32>
    %19 = math.exp %18 : vector<8x96xf32>
    %cst_16 = arith.constant 1.000000e+00 : f32
    %20 = vector.broadcast %cst_16 : f32 to vector<8x96xf32>
    %21 = arith.addf %20, %19 : vector<8x96xf32>
    %22 = arith.divf %20, %21 : vector<8x96xf32>
    %23 = vector.extract_strided_slice %16 {offsets = [0, 96], sizes = [8, 32], strides = [1, 1]} : vector<8x128xf32> to vector<8x32xf32>
    %24 = math.tanh %23 : vector<8x32xf32>
    %25 = vector.extract_strided_slice %22 {offsets = [0, 0], sizes = [8, 32], strides = [1, 1]} : vector<8x96xf32> to vector<8x32xf32>
    %26 = vector.extract_strided_slice %22 {offsets = [0, 32], sizes = [8, 32], strides = [1, 1]} : vector<8x96xf32> to vector<8x32xf32>
    %27 = vector.extract_strided_slice %22 {offsets = [0, 64], sizes = [8, 32], strides = [1, 1]} : vector<8x96xf32> to vector<8x32xf32>
    %28 = arith.mulf %26, %13 : vector<8x32xf32>
    %29 = arith.mulf %25, %24 : vector<8x32xf32>
    %30 = arith.addf %28, %29 : vector<8x32xf32>
    %31 = math.tanh %30 : vector<8x32xf32>
    %32 = arith.mulf %27, %31 : vector<8x32xf32>
    %c0_17 = arith.constant 0 : index
    %c0_18 = arith.constant 0 : index
    %c0_19 = arith.constant 0 : index
    %33 = vector.load %arg8[%c0_17, %c0_18, %c0_19] : memref<2x8x32xf32, #tpu.memory_space<vmem>>, vector<1x8x32xf32>
    %34 = vector.shape_cast %33 : vector<1x8x32xf32> to vector<8x32xf32>
    %35 = vector.shape_cast %32 : vector<8x32xf32> to vector<1x8x32xf32>
    tpu.vector_store %arg8[%c0_17, %c0_18, %c0_19], %35 {strides = array<i32>} : memref<2x8x32xf32, #tpu.memory_space<vmem>>, vector<1x8x32xf32>,
    %c0_20 = arith.constant 0 : index
    %c0_21 = arith.constant 0 : index
    %c0_22 = arith.constant 0 : index
    %36 = vector.load %arg9[%c0_20, %c0_21, %c0_22] : memref<2x8x32xf32, #tpu.memory_space<vmem>>, vector<1x8x32xf32>
    %37 = vector.shape_cast %36 : vector<1x8x32xf32> to vector<8x32xf32>
    %38 = vector.shape_cast %30 : vector<8x32xf32> to vector<1x8x32xf32>
    tpu.vector_store %arg9[%c0_20, %c0_21, %c0_22], %38 {strides = array<i32>} : memref<2x8x32xf32, #tpu.memory_space<vmem>>, vector<1x8x32xf32>,
    %c1_i32 = arith.constant 1 : i32
    %39 = arith.truncf %32 : vector<8x32xf32> to vector<8x32xbf16>
    %40 = arith.index_cast %c1_i32 : i32 to index
    %c0_23 = arith.constant 0 : index
    %c0_24 = arith.constant 0 : index
    %41 = vector.load %arg5[%40, %c0_23, %c0_24] : memref<2x32x128xbf16, #tpu.memory_space<vmem>>, vector<1x32x128xbf16>
    %42 = vector.shape_cast %41 : vector<1x32x128xbf16> to vector<32x128xbf16>
    %cst_25 = arith.constant dense<0.000000e+00> : vector<8x128xf32>
    %43 = tpu.matmul %39, %42, %cst_25 {dimension_numbers = #tpu.dot_dimension_numbers<[1], [0], [0], [1], [0, 0, 1, 1], [], []>} : vector<8x32xbf16>, vector<32x128xbf16>, vector<8x128xf32> -> vector<8x128xf32>
    %44 = arith.index_cast %c1_i32 : i32 to index
    %c0_26 = arith.constant 0 : index
    %c0_27 = arith.constant 0 : index
    %45 = vector.load %arg2[%44, %c0_26, %c0_27] : memref<2x8x32xf32, #tpu.memory_space<vmem>>, vector<1x8x32xf32>
    %46 = vector.shape_cast %45 : vector<1x8x32xf32> to vector<8x32xf32>
    %47 = arith.truncf %46 : vector<8x32xf32> to vector<8x32xbf16>
    %48 = arith.index_cast %c1_i32 : i32 to index
    %c0_28 = arith.constant 0 : index
    %c0_29 = arith.constant 0 : index
    %49 = vector.load %arg6[%48, %c0_28, %c0_29] : memref<2x32x128xbf16, #tpu.memory_space<vmem>>, vector<1x32x128xbf16>
    %50 = vector.shape_cast %49 : vector<1x32x128xbf16> to vector<32x128xbf16>
    %cst_30 = arith.constant dense<0.000000e+00> : vector<8x128xf32>
    %51 = tpu.matmul %47, %50, %cst_30 {dimension_numbers = #tpu.dot_dimension_numbers<[1], [0], [0], [1], [0, 0, 1, 1], [], []>} : vector<8x32xbf16>, vector<32x128xbf16>, vector<8x128xf32> -> vector<8x128xf32>
    %52 = arith.index_cast %c1_i32 : i32 to index
    %c0_31 = arith.constant 0 : index
    %c0_32 = arith.constant 0 : index
    %53 = vector.load %arg7[%52, %c0_31, %c0_32] : memref<2x1x128xf32, #tpu.memory_space<vmem>>, vector<1x1x128xf32>
    %54 = vector.shape_cast %53 : vector<1x1x128xf32> to vector<1x128xf32>
    %55 = arith.index_cast %c1_i32 : i32 to index
    %c0_33 = arith.constant 0 : index
    %c0_34 = arith.constant 0 : index
    %56 = vector.load %arg3[%55, %c0_33, %c0_34] : memref<2x8x32xf32, #tpu.memory_space<vmem>>, vector<1x8x32xf32>
    %57 = vector.shape_cast %56 : vector<1x8x32xf32> to vector<8x32xf32>
    %58 = arith.addf %43, %51 : vector<8x128xf32>
    %59 = vector.broadcast %54 : vector<1x128xf32> to vector<8x128xf32>
    %60 = arith.addf %58, %59 : vector<8x128xf32>
    %61 = vector.extract_strided_slice %60 {offsets = [0, 0], sizes = [8, 96], strides = [1, 1]} : vector<8x128xf32> to vector<8x96xf32>
    %62 = arith.negf %61 : vector<8x96xf32>
    %63 = math.exp %62 : vector<8x96xf32>
    %cst_35 = arith.constant 1.000000e+00 : f32
    %64 = vector.broadcast %cst_35 : f32 to vector<8x96xf32>
    %65 = arith.addf %64, %63 : vector<8x96xf32>
    %66 = arith.divf %64, %65 : vector<8x96xf32>
    %67 = vector.extract_strided_slice %60 {offsets = [0, 96], sizes = [8, 32], strides = [1, 1]} : vector<8x128xf32> to vector<8x32xf32>
    %68 = math.tanh %67 : vector<8x32xf32>
    %69 = vector.extract_strided_slice %66 {offsets = [0, 0], sizes = [8, 32], strides = [1, 1]} : vector<8x96xf32> to vector<8x32xf32>
    %70 = vector.extract_strided_slice %66 {offsets = [0, 32], sizes = [8, 32], strides = [1, 1]} : vector<8x96xf32> to vector<8x32xf32>
    %71 = vector.extract_strided_slice %66 {offsets = [0, 64], sizes = [8, 32], strides = [1, 1]} : vector<8x96xf32> to vector<8x32xf32>
    %72 = arith.mulf %70, %57 : vector<8x32xf32>
    %73 = arith.mulf %69, %68 : vector<8x32xf32>
    %74 = arith.addf %72, %73 : vector<8x32xf32>
    %75 = math.tanh %74 : vector<8x32xf32>
    %76 = arith.mulf %71, %75 : vector<8x32xf32>
    %77 = arith.index_cast %c1_i32 : i32 to index
    %c0_36 = arith.constant 0 : index
    %c0_37 = arith.constant 0 : index
    %78 = vector.load %arg8[%77, %c0_36, %c0_37] : memref<2x8x32xf32, #tpu.memory_space<vmem>>, vector<1x8x32xf32>
    %79 = vector.shape_cast %78 : vector<1x8x32xf32> to vector<8x32xf32>
    %80 = vector.shape_cast %76 : vector<8x32xf32> to vector<1x8x32xf32>
    tpu.vector_store %arg8[%77, %c0_36, %c0_37], %80 {strides = array<i32>} : memref<2x8x32xf32, #tpu.memory_space<vmem>>, vector<1x8x32xf32>,
    %81 = arith.index_cast %c1_i32 : i32 to index
    %c0_38 = arith.constant 0 : index
    %c0_39 = arith.constant 0 : index
    %82 = vector.load %arg9[%81, %c0_38, %c0_39] : memref<2x8x32xf32, #tpu.memory_space<vmem>>, vector<1x8x32xf32>
    %83 = vector.shape_cast %82 : vector<1x8x32xf32> to vector<8x32xf32>
    %84 = vector.shape_cast %74 : vector<8x32xf32> to vector<1x8x32xf32>
    tpu.vector_store %arg9[%81, %c0_38, %c0_39], %84 {strides = array<i32>} : memref<2x8x32xf32, #tpu.memory_space<vmem>>, vector<1x8x32xf32>,
    %c1_i32_40 = arith.constant 1 : i32
    return
  }
  func.func @transform_0(%arg0: i32) -> (i32, i32) {
    %c0_i32 = arith.constant 0 : i32
    %c0_i32_0 = arith.constant 0 : i32
    %c0_i32_1 = arith.constant 0 : i32
    return %c0_i32, %c0_i32_0 : i32, i32
  }
  func.func @transform_1(%arg0: i32) -> (i32, i32, i32) {
    %c0_i32 = arith.constant 0 : i32
    %c0_i32_0 = arith.constant 0 : i32
    %c0_i32_1 = arith.constant 0 : i32
    %c0_i32_2 = arith.constant 0 : i32
    return %c0_i32, %c0_i32_0, %c0_i32_1 : i32, i32, i32
  }
  func.func @transform_2(%arg0: i32) -> (i32, i32, i32) {
    %c0_i32 = arith.constant 0 : i32
    %c0_i32_0 = arith.constant 0 : i32
    %c0_i32_1 = arith.constant 0 : i32
    %c0_i32_2 = arith.constant 0 : i32
    return %c0_i32, %c0_i32_0, %c0_i32_1 : i32, i32, i32
  }
  func.func @transform_3(%arg0: i32) -> (i32, i32) {
    %c0_i32 = arith.constant 0 : i32
    %c0_i32_0 = arith.constant 0 : i32
    %c0_i32_1 = arith.constant 0 : i32
    return %c0_i32, %c0_i32_0 : i32, i32
  }
  func.func @transform_4(%arg0: i32) -> (i32, i32, i32) {
    %c0_i32 = arith.constant 0 : i32
    %c0_i32_0 = arith.constant 0 : i32
    %c0_i32_1 = arith.constant 0 : i32
    %c0_i32_2 = arith.constant 0 : i32
    return %c0_i32, %c0_i32_0, %c0_i32_1 : i32, i32, i32
  }
  func.func @transform_5(%arg0: i32) -> (i32, i32, i32) {
    %c0_i32 = arith.constant 0 : i32
    %c0_i32_0 = arith.constant 0 : i32
    %c0_i32_1 = arith.constant 0 : i32
    %c0_i32_2 = arith.constant 0 : i32
    return %c0_i32, %c0_i32_0, %c0_i32_1 : i32, i32, i32
  }
  func.func @transform_6(%arg0: i32) -> (i32, i32, i32) {
    %c0_i32 = arith.constant 0 : i32
    %c0_i32_0 = arith.constant 0 : i32
    %c0_i32_1 = arith.constant 0 : i32
    %c0_i32_2 = arith.constant 0 : i32
    return %c0_i32, %c0_i32_0, %c0_i32_1 : i32, i32, i32
  }
  func.func @transform_7(%arg0: i32) -> (i32, i32, i32) {
    %c0_i32 = arith.constant 0 : i32
    %c0_i32_0 = arith.constant 0 : i32
    %c0_i32_1 = arith.constant 0 : i32
    %c0_i32_2 = arith.constant 0 : i32
    return %c0_i32, %c0_i32_0, %c0_i32_1 : i32, i32, i32
  }
  func.func @transform_8(%arg0: i32) -> (i32, i32, i32) {
    %c0_i32 = arith.constant 0 : i32
    %c0_i32_0 = arith.constant 0 : i32
    %c0_i32_1 = arith.constant 0 : i32
    %c0_i32_2 = arith.constant 0 : i32
    return %c0_i32, %c0_i32_0, %c0_i32_1 : i32, i32, i32
  }
}

</mosaic_0001>

<llo_original>
// kernel: tpu_custom_call.1
$region0: #{tpu_custom_call.1}
  #allocation0 [shape = 'u32[]', space=smem, size = 0x4, offset = 0x4, fixed_abs, tag = 'smem constant byte address 0x4 - core index']
  #allocation1 [shape = 'u32[144,128]{1,0:T(1,128)}', space=vmem, size = 0x12000, scoped, tag = 'internal scratch']
  %s0 = inlined_call_operand.hbm [shape: f32[8,32], index: 0, kind: input, shape index: {}]
  %s1 = inlined_call_operand.hbm [shape: f32[2,8,32], index: 1, kind: input, shape index: {}]
  %s2 = inlined_call_operand.hbm [shape: f32[2,8,32], index: 2, kind: input, shape index: {}]
  %s3 = inlined_call_operand.hbm [shape: bf16[32,128], index: 3, kind: input, shape index: {}]
  %s4 = inlined_call_operand.hbm [shape: bf16[2,32,128], index: 4, kind: input, shape index: {}]
  %s5 = inlined_call_operand.hbm [shape: bf16[2,32,128], index: 5, kind: input, shape index: {}]
  %s6 = inlined_call_operand.vmem [shape: f32[2,1,128], index: 6, kind: input, shape index: {}]
  %s7 = inlined_call_operand.hbm [shape: f32[2,8,32], index: 7, kind: output, shape index: {0}]
  %s8 = inlined_call_operand.hbm [shape: f32[2,8,32], index: 8, kind: output, shape index: {1}]
  %9 = xla_tuple %s7, %s8
  %s10 = sld [smem:[#allocation0]]
  $region70: #{tpu_custom_call.1} parent=0
    _
  %s12 = ssub.s32 1, %s10
  %s13 = scalar_select 0, %s12, %s10
  $region1: #{tpu_custom_call.1} parent=0
    #allocation2 [shape = 'u8[4096]{0}', space=vmem, size = 0x1000, scoped, tag = 'input window, operand 0, single buffered']
    #allocation3 [shape = 's32[1]{0}', space=sflag, size = 0x4, scoped, tag = 'scoped memory for tpu_custom_call.1']
    #allocation4 [shape = 's32[1]{0}', space=sflag, size = 0x4, scoped, tag = 'scoped memory for tpu_custom_call.1']
    #allocation5 [shape = 'u8[8192]{0}', space=vmem, size = 0x2000, scoped, tag = 'input window, operand 1, single buffered']
    #allocation6 [shape = 's32[1]{0}', space=sflag, size = 0x4, scoped, tag = 'scoped memory for tpu_custom_call.1']
    #allocation7 [shape = 'u8[8192]{0}', space=vmem, size = 0x2000, scoped, tag = 'input window, operand 2, single buffered']
    #allocation8 [shape = 'u8[8192]{0}', space=vmem, size = 0x2000, scoped, tag = 'input window, operand 3, single buffered']
    #allocation9 [shape = 's32[1]{0}', space=sflag, size = 0x4, scoped, tag = 'scoped memory for tpu_custom_call.1']
    #allocation10 [shape = 'u8[16384]{0}', space=vmem, size = 0x4000, scoped, tag = 'input window, operand 4, single buffered']
    #allocation11 [shape = 'u8[16384]{0}', space=vmem, size = 0x4000, scoped, tag = 'input window, operand 5, single buffered']
    #allocation12 [shape = 's32[1]{0}', space=sflag, size = 0x4, scoped, tag = 'scoped memory for tpu_custom_call.1']
    #allocation13 [shape = 'u8[8192]{0}', space=vmem, size = 0x2000, scoped, tag = 'output window, operand 0, single buffered']
    #allocation14 [shape = 'u8[8192]{0}', space=vmem, size = 0x2000, scoped, tag = 'output window, operand 1, single buffered']
    #allocation15 [shape = 's32[1]{0}', space=sflag, size = 0x4, scoped, tag = 'scoped memory for tpu_custom_call.1']
    %14 = vsyncpa [#allocation3], 0
    %15 = vsyncpa [#allocation6], 0
    %16 = vsyncpa [#allocation9], 0
    %17 = vsyncpa [#allocation12], 0
    %18 = vsyncpa [#allocation4], 0
    %19 = vsyncpa [#allocation15], 0
    // Predicated region
    $region2: #{tpu_custom_call.1} parent=1 // pred_check
      _
    $region3: #{tpu_custom_call.1} parent=1 // pred_check_branch
      %21 = sbr.rel (0) target = $region5
    $region4: #{tpu_custom_call.1} parent=1 // pred_region
      %s23 = ssub.s32 128, 128
      %24 = vsyncadd [#allocation3], %s23
      %s26 = sshll.u32 [#allocation2], 4
      %s27 = int_to_ptr.vmem [resolvable:$true] %s26
      %29 = dma.hbm_to_vmem [thread:$0]  %s0, 128, %s27, [#allocation3]
    $region5: #{tpu_custom_call.1} parent=1 // pred_fallthru
      _
    // Predicated region
    $region6: #{tpu_custom_call.1} parent=1 // pred_check
      _
    $region7: #{tpu_custom_call.1} parent=1 // pred_check_branch
      %31 = sbr.rel (0) target = $region9
    $region8: #{tpu_custom_call.1} parent=1 // pred_region
      %s33 = ssub.s32 256, 256
      %34 = vsyncadd [#allocation6], %s33
      %s35 = sshll.u32 [#allocation5], 4
      %s36 = int_to_ptr.vmem [resolvable:$true] %s35
      %41 = dma.hbm_to_vmem [thread:$0]  %s1, 256, %s36, [#allocation6], 128, 128, 8
    $region9: #{tpu_custom_call.1} parent=1 // pred_fallthru
      _
    // Predicated region
    $region10: #{tpu_custom_call.1} parent=1 // pred_check
      _
    $region11: #{tpu_custom_call.1} parent=1 // pred_check_branch
      %43 = sbr.rel (0) target = $region13
    $region12: #{tpu_custom_call.1} parent=1 // pred_region
      %s45 = ssub.s32 256, 256
      %46 = vsyncadd [#allocation6], %s45
      %s47 = sshll.u32 [#allocation7], 4
      %s48 = int_to_ptr.vmem [resolvable:$true] %s47
      %53 = dma.hbm_to_vmem [thread:$0]  %s2, 256, %s48, [#allocation6], 128, 128, 8
    $region13: #{tpu_custom_call.1} parent=1 // pred_fallthru
      _
    // Predicated region
    $region14: #{tpu_custom_call.1} parent=1 // pred_check
      _
    $region15: #{tpu_custom_call.1} parent=1 // pred_check_branch
      %55 = sbr.rel (0) target = $region17
    $region16: #{tpu_custom_call.1} parent=1 // pred_region
      %s57 = ssub.s32 256, 256
      %58 = vsyncadd [#allocation9], %s57
      %s59 = sshll.u32 [#allocation8], 4
      %s60 = int_to_ptr.vmem [resolvable:$true] %s59
      %65 = dma.hbm_to_vmem [thread:$0]  %s3, 256, %s60, [#allocation9], 64, 64, 4
    $region17: #{tpu_custom_call.1} parent=1 // pred_fallthru
      _
    // Predicated region
    $region18: #{tpu_custom_call.1} parent=1 // pred_check
      _
    $region19: #{tpu_custom_call.1} parent=1 // pred_check_branch
      %67 = sbr.rel (0) target = $region21
    $region20: #{tpu_custom_call.1} parent=1 // pred_region
      %s69 = ssub.s32 512, 512
      %70 = vsyncadd [#allocation9], %s69
      %s71 = sshll.u32 [#allocation10], 4
      %s72 = int_to_ptr.vmem [resolvable:$true] %s71
      %77 = dma.hbm_to_vmem [thread:$0]  %s4, 512, %s72, [#allocation9], 64, 64, 4
    $region21: #{tpu_custom_call.1} parent=1 // pred_fallthru
      _
    // Predicated region
    $region22: #{tpu_custom_call.1} parent=1 // pred_check
      _
    $region23: #{tpu_custom_call.1} parent=1 // pred_check_branch
      %79 = sbr.rel (0) target = $region25
    $region24: #{tpu_custom_call.1} parent=1 // pred_region
      %s81 = ssub.s32 512, 512
      %82 = vsyncadd [#allocation12], %s81
      %s83 = sshll.u32 [#allocation11], 4
      %s84 = int_to_ptr.vmem [resolvable:$true] %s83
      %89 = dma.hbm_to_vmem [thread:$0]  %s5, 512, %s84, [#allocation12], 64, 64, 4
    $region25: #{tpu_custom_call.1} parent=1 // pred_fallthru
      _
    // Predicated region
    $region26: #{tpu_custom_call.1} parent=1 // pred_check
      _
    $region27: #{tpu_custom_call.1} parent=1 // pred_check_branch
      %91 = sbr.rel (0) target = $region29
    $region28: #{tpu_custom_call.1} parent=1 // pred_region
      _
    $region29: #{tpu_custom_call.1} parent=1 // pred_fallthru
      _
    // Predicated region
    $region30: #{tpu_custom_call.1} parent=1 // pred_check
      _
    $region31: #{tpu_custom_call.1} parent=1 // pred_check_branch
      %93 = sbr.rel (0) target = $region33
    $region32: #{tpu_custom_call.1} parent=1 // pred_region
      %94 = dma.done [#allocation3], 128
    $region33: #{tpu_custom_call.1} parent=1 // pred_fallthru
      _
    // Predicated region
    $region34: #{tpu_custom_call.1} parent=1 // pred_check
      _
    $region35: #{tpu_custom_call.1} parent=1 // pred_check_branch
      %96 = sbr.rel (0) target = $region37
    $region36: #{tpu_custom_call.1} parent=1 // pred_region
      %97 = dma.done [#allocation6], 256
    $region37: #{tpu_custom_call.1} parent=1 // pred_fallthru
      _
    // Predicated region
    $region38: #{tpu_custom_call.1} parent=1 // pred_check
      _
    $region39: #{tpu_custom_call.1} parent=1 // pred_check_branch
      %99 = sbr.rel (0) target = $region41
    $region40: #{tpu_custom_call.1} parent=1 // pred_region
      %100 = dma.done [#allocation6], 256
    $region41: #{tpu_custom_call.1} parent=1 // pred_fallthru
      _
    // Predicated region
    $region42: #{tpu_custom_call.1} parent=1 // pred_check
      _
    $region43: #{tpu_custom_call.1} parent=1 // pred_check_branch
      %102 = sbr.rel (0) target = $region45
    $region44: #{tpu_custom_call.1} parent=1 // pred_region
      %103 = dma.done [#allocation9], 256
    $region45: #{tpu_custom_call.1} parent=1 // pred_fallthru
      _
    // Predicated region
    $region46: #{tpu_custom_call.1} parent=1 // pred_check
      _
    $region47: #{tpu_custom_call.1} parent=1 // pred_check_branch
      %105 = sbr.rel (0) target = $region49
    $region48: #{tpu_custom_call.1} parent=1 // pred_region
      %106 = dma.done [#allocation9], 512
    $region49: #{tpu_custom_call.1} parent=1 // pred_fallthru
      _
    // Predicated region
    $region50: #{tpu_custom_call.1} parent=1 // pred_check
      _
    $region51: #{tpu_custom_call.1} parent=1 // pred_check_branch
      %108 = sbr.rel (0) target = $region53
    $region52: #{tpu_custom_call.1} parent=1 // pred_region
      %109 = dma.done [#allocation12], 512
    $region53: #{tpu_custom_call.1} parent=1 // pred_fallthru
      _
    %v111 = vld [vmem:[#allocation2] sm:$0xff]
    %v112 = vpack.c.bf16 %v111, %v111
    %v113 = vld [vmem:[#allocation8] sm:$0xf]
    %v114 = vld [vmem:[#allocation8 + $0x4] sm:$0xf]
    %v115 = vld [vmem:[#allocation8 + $0x8] sm:$0xf]
    %v116 = vld [vmem:[#allocation8 + $0xc] sm:$0xf]
    %v117 = vld [vmem:[#allocation5] sm:$0xff]
    %v118 = vpack.c.bf16 %v117, %v117
    %v119 = vld [vmem:[#allocation11] sm:$0xf]
    %v120 = vld [vmem:[#allocation11 + $0x4] sm:$0xf]
    %v121 = vld [vmem:[#allocation11 + $0x8] sm:$0xf]
    %v122 = vld [vmem:[#allocation11 + $0xc] sm:$0xf]
    %v127 = vunpack.c.l.b16 %v119
    %v128 = vunpack.c.l.b16 %v120
    %v129 = vunpack.c.l.b16 %v121
    %v130 = vunpack.c.l.b16 %v122
    %v131 = vpack.c.b16 %v128, %v127
    %v132 = vpack.c.b16 %v130, %v129
    %vm135 = vcmask 261120
    %v137 = vsel %vm135, %v118, 0
    %139 = vmatprep.subr.bf16.mxu0 0
    %140 = vmatpush1.bf16.msra.mxu0 0
    %141 = vmatprep.subr.bf16.mxu0 0
    %142 = vmatpush1.bf16.msra.mxu0 0
    %143 = vmatprep.subr.bf16.mxu0 0
    %144 = vmatpush1.bf16.msra.mxu0 0
    %145 = vmatprep.subr.bf16.mxu0 0
    %146 = vmatpush1.bf16.msra.mxu0 0
    %147 = vmatprep.subr.bf16.mxu0 0
    %148 = vmatpush1.bf16.msra.mxu0 0
    %149 = vmatprep.subr.bf16.mxu0 0
    %150 = vmatpush1.bf16.msra.mxu0 0
    %151 = vmatprep.subr.bf16.mxu0 0
    %152 = vmatpush1.bf16.msra.mxu0 %v132
    %153 = vmatprep.subr.bf16.mxu0 0
    %154 = vmatpush1.bf16.msra.mxu0 %v131
    %155 = vmatprep.subr.bf16.mxu0 0
    %156 = vmatpush2.bf16.msra.mxu0 0
    %157 = vmatprep.subr.bf16.mxu0 0
    %158 = vmatpush2.bf16.msra.mxu0 0
    %159 = vmatprep.subr.bf16.mxu0 0
    %160 = vmatpush2.bf16.msra.mxu0 0
    %161 = vmatprep.subr.bf16.mxu0 0
    %162 = vmatpush2.bf16.msra.mxu0 0
    %163 = vmatprep.subr.bf16.mxu0 0
    %164 = vmatpush2.bf16.msra.mxu0 0
    %165 = vmatprep.subr.bf16.mxu0 0
    %166 = vmatpush2.bf16.msra.mxu0 0
    %167 = vmatprep.subr.bf16.mxu0 0
    %168 = vmatpush2.bf16.msra.mxu0 0
    %169 = vmatprep.subr.bf16.mxu0 0
    %170 = vmatpush2.bf16.msra.mxu0 0
    %171 = vmatprep.mubr.bf16.mxu0 0
    %172 = vmatmul.mubr.bf16.gmra.mxu0 %v137
    %v173 = vpop.f32.mrf.mxu0
    %v174 = vadd.f32 0.0, %v173
    %v175 = vpop.f32.mrf.mxu0
    %v176 = vpop.f32.mrf.mxu0
    %v177 = vpop.f32.mrf.mxu0
    %178 = vdwg.mxu0
    %v179 = vld [vmem:[%s6] sm:$0x1]
    %v180 = vld [vmem:[#allocation7] sm:$0xff]
    %v185 = vunpack.c.l.b16 %v113
    %v186 = vunpack.c.l.b16 %v114
    %v187 = vunpack.c.l.b16 %v115
    %v188 = vunpack.c.l.b16 %v116
    %v189 = vpack.c.b16 %v186, %v185
    %v190 = vpack.c.b16 %v188, %v187
    %v194 = vsel %vm135, %v112, 0
    %196 = vmatprep.subr.bf16.mxu0 0
    %197 = vmatpush1.bf16.msra.mxu0 0
    %198 = vmatprep.subr.bf16.mxu0 0
    %199 = vmatpush1.bf16.msra.mxu0 0
    %200 = vmatprep.subr.bf16.mxu0 0
    %201 = vmatpush1.bf16.msra.mxu0 0
    %202 = vmatprep.subr.bf16.mxu0 0
    %203 = vmatpush1.bf16.msra.mxu0 0
    %204 = vmatprep.subr.bf16.mxu0 0
    %205 = vmatpush1.bf16.msra.mxu0 0
    %206 = vmatprep.subr.bf16.mxu0 0
    %207 = vmatpush1.bf16.msra.mxu0 0
    %208 = vmatprep.subr.bf16.mxu0 0
    %209 = vmatpush1.bf16.msra.mxu0 %v190
    %210 = vmatprep.subr.bf16.mxu0 0
    %211 = vmatpush1.bf16.msra.mxu0 %v189
    %212 = vmatprep.subr.bf16.mxu0 0
    %213 = vmatpush2.bf16.msra.mxu0 0
    %214 = vmatprep.subr.bf16.mxu0 0
    %215 = vmatpush2.bf16.msra.mxu0 0
    %216 = vmatprep.subr.bf16.mxu0 0
    %217 = vmatpush2.bf16.msra.mxu0 0
    %218 = vmatprep.subr.bf16.mxu0 0
    %219 = vmatpush2.bf16.msra.mxu0 0
    %220 = vmatprep.subr.bf16.mxu0 0
    %221 = vmatpush2.bf16.msra.mxu0 0
    %222 = vmatprep.subr.bf16.mxu0 0
    %223 = vmatpush2.bf16.msra.mxu0 0
    %224 = vmatprep.subr.bf16.mxu0 0
    %225 = vmatpush2.bf16.msra.mxu0 0
    %226 = vmatprep.subr.bf16.mxu0 0
    %227 = vmatpush2.bf16.msra.mxu0 0
    %228 = vmatprep.mubr.bf16.mxu0 0
    %229 = vmatmul.mubr.bf16.gmra.mxu0 %v194
    %v230 = vpop.f32.mrf.mxu0
    %v231 = vadd.f32 %v174, %v230
    %v232 = vpop.f32.mrf.mxu0
    %v233 = vpop.f32.mrf.mxu0
    %v234 = vpop.f32.mrf.mxu0
    %235 = vdwg.mxu0
    %v237 = vlaneseq
    %v238 = vshrl.u32 %v237, 7
    %v239 = vsub.s32 0, %v238
    %v240 = vrot.slane %v179, %v239
    %v242 = vadd.f32 %v231, %v240
    %v243 = vxor.u32 %v242, 2147483648
    %v244 = vmul.f32 %v243, 1.442695
    %v245 = vpow.pop %v244
    %v246 = vadd.f32 %v245, 1.0
    %v247 = vrcp.pop %v246
    %v248 = vmul.f32 1.0, %v247
    %v249 = vtanh.pop %v242
    %251 = vrot.lane.b32.xlu0 %v180, 32
    %v252 = vpop.permute.xlu0 %251
    %v254 = vmul.f32 %v248, %v252
    %256 = vrot.lane.b32.xlu0 %v249, 32
    %v257 = vpop.permute.xlu0 %256
    %v259 = vmul.f32 %v248, %v257
    %261 = vrot.lane.b32.xlu0 %v259, 32
    %v262 = vpop.permute.xlu0 %261
    %v264 = vadd.f32 %v254, %v262
    %v265 = vtanh.pop %v264
    %267 = vrot.lane.b32.xlu0 %v265, 32
    %v268 = vpop.permute.xlu0 %267
    %v270 = vmul.f32 %v248, %v268
    %272 = vrot.lane.b32.xlu0 %v270, 64
    %v273 = vpop.permute.xlu0 %272
    %275 = vst.msk [vmem:[#allocation13] sm:$0xff] %vm135, %v273
    %277 = vrot.lane.b32.xlu0 %v264, 96
    %v278 = vpop.permute.xlu0 %277
    %280 = vst.msk [vmem:[#allocation14] sm:$0xff] %vm135, %v278
    %v281 = vpack.c.bf16 %v270, %v270
    %s282 = scalar_lea.vmem [#allocation10], 16
    %v283 = vld [vmem:[%s282] sm:$0xf]
    %v284 = vld [vmem:[%s282 + $0x4] sm:$0xf]
    %v285 = vld [vmem:[%s282 + $0x8] sm:$0xf]
    %v286 = vld [vmem:[%s282 + $0xc] sm:$0xf]
    %s287 = scalar_lea.vmem [#allocation5], 8
    %v288 = vld [vmem:[%s287] sm:$0xff]
    %v289 = vpack.c.bf16 %v288, %v288
    %s290 = scalar_lea.vmem [#allocation11], 16
    %v291 = vld [vmem:[%s290] sm:$0xf]
    %v292 = vld [vmem:[%s290 + $0x4] sm:$0xf]
    %v293 = vld [vmem:[%s290 + $0x8] sm:$0xf]
    %v294 = vld [vmem:[%s290 + $0xc] sm:$0xf]
    %v299 = vunpack.c.l.b16 %v291
    %v300 = vunpack.c.l.b16 %v292
    %v301 = vunpack.c.l.b16 %v293
    %v302 = vunpack.c.l.b16 %v294
    %v303 = vpack.c.b16 %v300, %v299
    %v304 = vpack.c.b16 %v302, %v301
    %v308 = vsel %vm135, %v289, 0
    %310 = vmatprep.subr.bf16.mxu0 0
    %311 = vmatpush1.bf16.msra.mxu0 0
    %312 = vmatprep.subr.bf16.mxu0 0
    %313 = vmatpush1.bf16.msra.mxu0 0
    %314 = vmatprep.subr.bf16.mxu0 0
    %315 = vmatpush1.bf16.msra.mxu0 0
    %316 = vmatprep.subr.bf16.mxu0 0
    %317 = vmatpush1.bf16.msra.mxu0 0
    %318 = vmatprep.subr.bf16.mxu0 0
    %319 = vmatpush1.bf16.msra.mxu0 0
    %320 = vmatprep.subr.bf16.mxu0 0
    %321 = vmatpush1.bf16.msra.mxu0 0
    %322 = vmatprep.subr.bf16.mxu0 0
    %323 = vmatpush1.bf16.msra.mxu0 %v304
    %324 = vmatprep.subr.bf16.mxu0 0
    %325 = vmatpush1.bf16.msra.mxu0 %v303
    %326 = vmatprep.subr.bf16.mxu0 0
    %327 = vmatpush2.bf16.msra.mxu0 0
    %328 = vmatprep.subr.bf16.mxu0 0
    %329 = vmatpush2.bf16.msra.mxu0 0
    %330 = vmatprep.subr.bf16.mxu0 0
    %331 = vmatpush2.bf16.msra.mxu0 0
    %332 = vmatprep.subr.bf16.mxu0 0
    %333 = vmatpush2.bf16.msra.mxu0 0
    %334 = vmatprep.subr.bf16.mxu0 0
    %335 = vmatpush2.bf16.msra.mxu0 0
    %336 = vmatprep.subr.bf16.mxu0 0
    %337 = vmatpush2.bf16.msra.mxu0 0
    %338 = vmatprep.subr.bf16.mxu0 0
    %339 = vmatpush2.bf16.msra.mxu0 0
    %340 = vmatprep.subr.bf16.mxu0 0
    %341 = vmatpush2.bf16.msra.mxu0 0
    %342 = vmatprep.mubr.bf16.mxu0 0
    %343 = vmatmul.mubr.bf16.gmra.mxu0 %v308
    %v344 = vpop.f32.mrf.mxu0
    %v345 = vadd.f32 0.0, %v344
    %v346 = vpop.f32.mrf.mxu0
    %v347 = vpop.f32.mrf.mxu0
    %v348 = vpop.f32.mrf.mxu0
    %349 = vdwg.mxu0
    %s350 = scalar_lea.vmem %s6, 1
    %v351 = vld [vmem:[%s350] sm:$0x1]
    %s352 = scalar_lea.vmem [#allocation7], 8
    %v353 = vld [vmem:[%s352] sm:$0xff]
    %355 = vrot.lane.b32.xlu0 %v281, 64
    %v356 = vpop.permute.xlu0 %355
    %v361 = vunpack.c.l.b16 %v283
    %v362 = vunpack.c.l.b16 %v284
    %v363 = vunpack.c.l.b16 %v285
    %v364 = vunpack.c.l.b16 %v286
    %v365 = vpack.c.b16 %v362, %v361
    %v366 = vpack.c.b16 %v364, %v363
    %v370 = vsel %vm135, %v356, 0
    %372 = vmatprep.subr.bf16.mxu0 0
    %373 = vmatpush1.bf16.msra.mxu0 0
    %374 = vmatprep.subr.bf16.mxu0 0
    %375 = vmatpush1.bf16.msra.mxu0 0
    %376 = vmatprep.subr.bf16.mxu0 0
    %377 = vmatpush1.bf16.msra.mxu0 0
    %378 = vmatprep.subr.bf16.mxu0 0
    %379 = vmatpush1.bf16.msra.mxu0 0
    %380 = vmatprep.subr.bf16.mxu0 0
    %381 = vmatpush1.bf16.msra.mxu0 0
    %382 = vmatprep.subr.bf16.mxu0 0
    %383 = vmatpush1.bf16.msra.mxu0 0
    %384 = vmatprep.subr.bf16.mxu0 0
    %385 = vmatpush1.bf16.msra.mxu0 %v366
    %386 = vmatprep.subr.bf16.mxu0 0
    %387 = vmatpush1.bf16.msra.mxu0 %v365
    %388 = vmatprep.subr.bf16.mxu0 0
    %389 = vmatpush2.bf16.msra.mxu0 0
    %390 = vmatprep.subr.bf16.mxu0 0
    %391 = vmatpush2.bf16.msra.mxu0 0
    %392 = vmatprep.subr.bf16.mxu0 0
    %393 = vmatpush2.bf16.msra.mxu0 0
    %394 = vmatprep.subr.bf16.mxu0 0
    %395 = vmatpush2.bf16.msra.mxu0 0
    %396 = vmatprep.subr.bf16.mxu0 0
    %397 = vmatpush2.bf16.msra.mxu0 0
    %398 = vmatprep.subr.bf16.mxu0 0
    %399 = vmatpush2.bf16.msra.mxu0 0
    %400 = vmatprep.subr.bf16.mxu0 0
    %401 = vmatpush2.bf16.msra.mxu0 0
    %402 = vmatprep.subr.bf16.mxu0 0
    %403 = vmatpush2.bf16.msra.mxu0 0
    %404 = vmatprep.mubr.bf16.mxu0 0
    %405 = vmatmul.mubr.bf16.gmra.mxu0 %v370
    %v406 = vpop.f32.mrf.mxu0
    %v407 = vadd.f32 %v345, %v406
    %v408 = vpop.f32.mrf.mxu0
    %v409 = vpop.f32.mrf.mxu0
    %v410 = vpop.f32.mrf.mxu0
    %411 = vdwg.mxu0
    %v413 = vlaneseq
    %v414 = vshrl.u32 %v413, 7
    %v415 = vsub.s32 0, %v414
    %v416 = vrot.slane %v351, %v415
    %v418 = vadd.f32 %v407, %v416
    %v419 = vxor.u32 %v418, 2147483648
    %v420 = vmul.f32 %v419, 1.442695
    %v421 = vpow.pop %v420
    %v422 = vadd.f32 %v421, 1.0
    %v423 = vrcp.pop %v422
    %v424 = vmul.f32 1.0, %v423
    %v425 = vtanh.pop %v418
    %427 = vrot.lane.b32.xlu0 %v353, 32
    %v428 = vpop.permute.xlu0 %427
    %v430 = vmul.f32 %v424, %v428
    %432 = vrot.lane.b32.xlu0 %v425, 32
    %v433 = vpop.permute.xlu0 %432
    %v435 = vmul.f32 %v424, %v433
    %437 = vrot.lane.b32.xlu0 %v435, 32
    %v438 = vpop.permute.xlu0 %437
    %v440 = vadd.f32 %v430, %v438
    %v441 = vtanh.pop %v440
    %443 = vrot.lane.b32.xlu0 %v441, 32
    %v444 = vpop.permute.xlu0 %443
    %v446 = vmul.f32 %v424, %v444
    %448 = vrot.lane.b32.xlu0 %v446, 64
    %v449 = vpop.permute.xlu0 %448
    %s451 = scalar_lea.vmem [#allocation13], 8
    %452 = vst.msk [vmem:[%s451] sm:$0xff] %vm135, %v449
    %454 = vrot.lane.b32.xlu0 %v440, 96
    %v455 = vpop.permute.xlu0 %454
    %s457 = scalar_lea.vmem [#allocation14], 8
    %458 = vst.msk [vmem:[%s457] sm:$0xff] %vm135, %v455
    // Predicated region
    $region54: #{tpu_custom_call.1} parent=1 // pred_check
      _
    $region55: #{tpu_custom_call.1} parent=1 // pred_check_branch
      %460 = sbr.rel (0) target = $region57
    $region56: #{tpu_custom_call.1} parent=1 // pred_region
      %s462 = ssub.s32 256, 256
      %463 = vsyncadd [#allocation4], %s462
      %s464 = sshll.u32 [#allocation13], 4
      %s465 = int_to_ptr.vmem [resolvable:$true] %s464
      %470 = dma.vmem_to_hbm [thread:$0]  %s465, 256, %s7, [#allocation4], 128, 128, 8
    $region57: #{tpu_custom_call.1} parent=1 // pred_fallthru
      _
    // Predicated region
    $region58: #{tpu_custom_call.1} parent=1 // pred_check
      _
    $region59: #{tpu_custom_call.1} parent=1 // pred_check_branch
      %472 = sbr.rel (0) target = $region61
    $region60: #{tpu_custom_call.1} parent=1 // pred_region
      %s474 = ssub.s32 256, 256
      %475 = vsyncadd [#allocation15], %s474
      %s476 = sshll.u32 [#allocation14], 4
      %s477 = int_to_ptr.vmem [resolvable:$true] %s476
      %482 = dma.vmem_to_hbm [thread:$0]  %s477, 256, %s8, [#allocation15], 128, 128, 8
    $region61: #{tpu_custom_call.1} parent=1 // pred_fallthru
      _
    // Predicated region
    $region62: #{tpu_custom_call.1} parent=1 // pred_check
      _
    $region63: #{tpu_custom_call.1} parent=1 // pred_check_branch
      %484 = sbr.rel (0) target = $region65
    $region64: #{tpu_custom_call.1} parent=1 // pred_region
      %485 = dma.done [#allocation4], 256
    $region65: #{tpu_custom_call.1} parent=1 // pred_fallthru
      _
    // Predicated region
    $region66: #{tpu_custom_call.1} parent=1 // pred_check
      _
    $region67: #{tpu_custom_call.1} parent=1 // pred_check_branch
      %487 = sbr.rel (0) target = $region69
    $region68: #{tpu_custom_call.1} parent=1 // pred_region
      %488 = dma.done [#allocation15], 256
    $region69: #{tpu_custom_call.1} parent=1 // pred_fallthru
      _
    %489 = vsyncpa [#allocation3], 1
    %490 = vsyncpa [#allocation6], 1
    %491 = vsyncpa [#allocation9], 1
    %492 = vsyncpa [#allocation12], 1
    %493 = vsyncpa [#allocation4], 1
    %494 = vsyncpa [#allocation15], 1

</llo_original>
